<compile_context>
chip_gen: v7x
topology: tpu7x:2x2x1
jax: 0.10.0
libtpu: 0.0.40
codegen_flags: <defaults>
</compile_context>

<pallas_src>
import jax
import jax.numpy as jnp
from jax import lax
from jax.experimental import pallas as pl
from jax.experimental.pallas import tpu as pltpu


def _round_up(n, m):
    return ((n + m - 1) // m) * m


def _working_set_bytes(Bb, T, C, H, in_bytes):
    """Rough per-grid-step VMEM live set (pipeline buffers + temporaries)."""
    rows = Bb * T
    est = 0
    est += 2 * rows * C * in_bytes        # x block (double-buffered)
    est += 2 * C * 3 * H * in_bytes       # packed qkv weight (double-buffered)
    est += 2 * rows * H * in_bytes        # output block (double-buffered)
    est += rows * 3 * H * 4               # f32 qkv projection result
    est += rows * 3 * H * in_bytes        # q/k/v cast to input dtype
    est += 3 * Bb * T * T * 4             # wei, e, p f32 temporaries
    est += rows * H * 4                   # f32 p@v accumulator
    return est


def _pick_batch_block(B, T, C, H, in_bytes,
                      target_rows=2048, working_set_budget=24 << 20):
    """Largest divisor of B such that:
       * the grid has >= 2 steps whenever B >= 2 (megacore + DMA pipelining),
       * rows per step stay near target_rows (amortize ~0.35us/step overhead),
       * the estimated per-step VMEM live set fits a v7x-safe budget."""
    cap = max(1, B // 2)                  # guarantee >= 2 grid steps when B >= 2
    best = 1
    for bb in range(1, cap + 1):
        if B % bb:
            continue
        if bb * T > max(target_rows, T):
            continue
        if bb > 1 and _working_set_bytes(bb, T, C, H, in_bytes) > working_set_budget:
            continue
        best = bb
    return best


def _head_kernel(x_ref, w_ref, o_ref):
    """One grid step = one block of Bb batch elements.

    x_ref: (Bb, T, C)   activations
    w_ref: (C, 3*H)     tightly packed [q | k | v] weights; q pre-scaled by
                        head_size**-0.5 (folded in f32 before the dtype cast).
    o_ref: (Bb, T, H)   attention output (true head width, no lane padding).
    """
    Bb, T, C = x_ref.shape
    H = w_ref.shape[-1] // 3
    in_dtype = x_ref.dtype

    # --- fused QKV projection: one MXU matmul over all Bb*T rows, f32 acc ---
    x2d = x_ref[...].reshape(Bb * T, C)
    qkv = jnp.dot(x2d, w_ref[...], preferred_element_type=jnp.float32)

    # Cast q/k/v back to the input dtype so the score and p@v matmuls take the
    # fast (bf16) MXU path when x is bf16; accumulation stays f32 below.
    qkv = qkv.astype(in_dtype)
    q = qkv[:, 0 * H:1 * H].reshape(Bb, T, H)   # scale already folded in
    k = qkv[:, 1 * H:2 * H].reshape(Bb, T, H)
    v = qkv[:, 2 * H:3 * H].reshape(Bb, T, H)

    # --- scores: contract head dims directly (no explicit k transpose) ------
    wei = lax.dot_general(q, k, (((2,), (2,)), ((0,), (0,))),
                          preferred_element_type=jnp.float32)   # (Bb, T, T)

    # --- causal mask from small broadcast iotas ------------------------------
    # If T was padded, the padded key columns (col >= real T > row) are masked
    # out here for every real query row.
    row = lax.broadcasted_iota(jnp.int32, (1, T, 1), 1)
    col = lax.broadcasted_iota(jnp.int32, (1, 1, T), 2)
    wei = jnp.where(col <= row, wei, -jnp.inf)

    # --- numerically stable softmax; reciprocal on the otherwise-idle EUP ---
    m = jnp.max(wei, axis=-1, keepdims=True)
    e = jnp.exp(wei - m)
    s = jnp.sum(e, axis=-1, keepdims=True)
    p = e * pl.reciprocal(s, approx=True)

    # Dropout p=0.0 -> identity (module default).
    # TODO(synk): add dropout via pltpu.prng_seed/prng_random_bits (seed varied
    # per batch-block) if a nonzero dropout rate is ever required.
    # TODO(synk): for non-toy T (>~1K), switch to a KV-tiled online-softmax
    # (flash) loop with causal tile skipping via pl.when so the (T, T) scores
    # are never materialized (required for v7x's 64 MiB VMEM).

    # --- probabilities @ V (MXU fed in input dtype, f32 accumulation) -------
    out = lax.dot_general(p.astype(in_dtype), v,
                          (((2,), (1,)), ((0,), (0,))),
                          preferred_element_type=jnp.float32)   # (Bb, T, H)
    o_ref[...] = out.astype(o_ref.dtype)


def pack_head_weights(wq, wk, wv, head_dtype):
    """Pack [q | k | v] into one tight (C, 3*H) weight, folding head_size**-0.5
    into q in f32 before the cast.  Call ONCE at init, not per forward."""
    H = wk.shape[-1]
    scale = jnp.float32(H) ** -0.5
    w = jnp.concatenate([wq.astype(jnp.float32) * scale,
                         wk.astype(jnp.float32),
                         wv.astype(jnp.float32)], axis=-1)
    return w.astype(head_dtype)


@jax.jit
def head_forward(x, w_packed):
    """x: (B, T, C); w_packed: (C, 3*H) from pack_head_weights. -> (B, T, H)."""
    B, T, C = x.shape
    H = w_packed.shape[-1] // 3

    # Pad T to a sublane multiple so the in-kernel (Bb,T,C)->(Bb*T,C) flatten
    # and the q/k/v splits are no-copy relayouts.  Padded query rows are
    # sliced off below; padded key columns are removed by the causal mask.
    Tp = _round_up(T, 8)
    if Tp != T:
        x = jnp.pad(x, ((0, 0), (0, Tp - T), (0, 0)))

    in_bytes = jnp.dtype(x.dtype).itemsize
    Bb = _pick_batch_block(B, Tp, C, H, in_bytes)
    est = _working_set_bytes(Bb, Tp, C, H, in_bytes)
    vmem_limit = int(min(max(2 * est, 32 << 20), 64 << 20))

    out = pl.pallas_call(
        _head_kernel,
        out_shape=jax.ShapeDtypeStruct((B, Tp, H), x.dtype),
        grid_spec=pltpu.PrefetchScalarGridSpec(
            num_scalar_prefetch=0,
            grid=(B // Bb,),
            in_specs=[
                pl.BlockSpec((Bb, Tp, C), lambda b: (b, 0, 0)),
                # Invariant packed-weight block (constant index map).  Kept at
                # default buffering: at this C the block is only a few KB, so
                # single-buffering via pipeline_mode=pl.Buffered(1) only pays
                # off at large C.
                pl.BlockSpec((C, 3 * H), lambda b: (0, 0)),
            ],
            out_specs=pl.BlockSpec((Bb, Tp, H), lambda b: (b, 0, 0)),
        ),
        compiler_params=pltpu.CompilerParams(
            dimension_semantics=("parallel",),
            vmem_limit_bytes=vmem_limit),
    )(x, w_packed)

    # Only strips query-row padding; no lane-padding slice anymore.
    return out[:, :T, :] if Tp != T else out


def reference_head(x, wk, wq, wv):
    """Pure-JAX reference mirroring the PyTorch forward."""
    k = x @ wk
    q = x @ wq
    v = x @ wv
    wei = (q @ jnp.swapaxes(k, -2, -1)) * (k.shape[-1] ** -0.5)
    T = x.shape[-2]
    tril = jnp.tril(jnp.ones((T, T), dtype=bool))
    wei = jnp.where(tril, wei, -jnp.inf)
    wei = jax.nn.softmax(wei, axis=-1)
    return wei @ v


if __name__ == "__main__":
    # Small shapes consistent with the module: B=2, T(block_size)=8,
    # n_embd=32, head_size=16.
    B, T, C, H = 2, 8, 32, 16

    key = jax.random.PRNGKey(0)
    kx, kk, kq, kv = jax.random.split(key, 4)

    x = jax.random.normal(kx, (B, T, C), dtype=jnp.float32)
    # nn.Linear(n_embd, head_size, bias=False) weight is (H, C); we store the
    # transposed (C, H) form so the kernel computes x @ W.
    bound = 1.0 / (C ** 0.5)
    wk = jax.random.uniform(kk, (C, H), jnp.float32, -bound, bound)
    wq = jax.random.uniform(kq, (C, H), jnp.float32, -bound, bound)
    wv = jax.random.uniform(kv, (C, H), jnp.float32, -bound, bound)

    # Pack once at init (hoisted out of the per-forward path).
    w_packed = pack_head_weights(wq, wk, wv, x.dtype)

    out = head_forward(x, w_packed)
    jax.block_until_ready(out)

    ref = reference_head(x, wk, wq, wv)
    assert out.shape == (B, T, H)
    # Tolerance absorbs the EUP approximate reciprocal in the softmax denom.
    assert jnp.allclose(out, ref, atol=2e-3, rtol=2e-3), "mismatch vs reference"

    print("KERNEL_OK")
</pallas_src>

<mosaic_0001>
module attributes {stable_mosaic.version = 11 : i64} {
  func.func @_head_kernel(%arg0: i32, %arg1: memref<1x8x32xf32, #tpu.memory_space<vmem>>, %arg2: memref<32x48xf32, #tpu.memory_space<vmem>>, %arg3: memref<1x8x16xf32, #tpu.memory_space<vmem>>) attributes {dimension_semantics = [#tpu.dimension_semantics<parallel>], iteration_bounds = array<i64: 2>, scalar_prefetch = 0 : i64, scratch_operands = 0 : i64, tpu.core_type = #tpu.core_type<tc>, window_params = [{transform_indices = @transform_0, window_bounds = array<i64: 1, 8, 32>}, {pipeline_mode = #tpu.pipeline_mode<synchronous>, transform_indices = @transform_1, window_bounds = array<i64: 32, 48>}, {transform_indices = @transform_2, window_bounds = array<i64: 1, 8, 16>}]} {
    %c0 = arith.constant 0 : index
    %c0_0 = arith.constant 0 : index
    %c0_1 = arith.constant 0 : index
    %0 = vector.load %arg1[%c0, %c0_0, %c0_1] : memref<1x8x32xf32, #tpu.memory_space<vmem>>, vector<1x8x32xf32>
    %1 = vector.shape_cast %0 : vector<1x8x32xf32> to vector<8x32xf32>
    %c0_2 = arith.constant 0 : index
    %c0_3 = arith.constant 0 : index
    %2 = vector.load %arg2[%c0_2, %c0_3] : memref<32x48xf32, #tpu.memory_space<vmem>>, vector<32x48xf32>
    %cst = arith.constant dense<0.000000e+00> : vector<8x48xf32>
    %3 = tpu.matmul %1, %2, %cst {dimension_numbers = #tpu.dot_dimension_numbers<[1], [0], [0], [1], [0, 0, 1, 1], [], []>} : vector<8x32xf32>, vector<32x48xf32>, vector<8x48xf32> -> vector<8x48xf32>
    %4 = vector.extract_strided_slice %3 {offsets = [0, 0], sizes = [8, 16], strides = [1, 1]} : vector<8x48xf32> to vector<8x16xf32>
    %5 = vector.shape_cast %4 : vector<8x16xf32> to vector<1x8x16xf32>
    %6 = vector.extract_strided_slice %3 {offsets = [0, 16], sizes = [8, 16], strides = [1, 1]} : vector<8x48xf32> to vector<8x16xf32>
    %7 = vector.shape_cast %6 : vector<8x16xf32> to vector<1x8x16xf32>
    %8 = vector.extract_strided_slice %3 {offsets = [0, 32], sizes = [8, 16], strides = [1, 1]} : vector<8x48xf32> to vector<8x16xf32>
    %9 = vector.shape_cast %8 : vector<8x16xf32> to vector<1x8x16xf32>
    %cst_4 = arith.constant dense<0.000000e+00> : vector<1x8x8xf32>
    %10 = tpu.matmul %5, %7, %cst_4 {dimension_numbers = #tpu.dot_dimension_numbers<[2], [2], [1], [1], [0, 0, 0, 1, 1, 1], [0], [0]>} : vector<1x8x16xf32>, vector<1x8x16xf32>, vector<1x8x8xf32> -> vector<1x8x8xf32>
    %11 = tpu.iota {dimensions = array<i32: 1>} : vector<1x8x1xi32>
    %12 = tpu.iota {dimensions = array<i32: 2>} : vector<1x1x8xi32>
    %13 = vector.broadcast %12 : vector<1x1x8xi32> to vector<1x8x8xi32>
    %14 = vector.broadcast %11 : vector<1x8x1xi32> to vector<1x8x8xi32>
    %15 = arith.cmpi sle, %13, %14 : vector<1x8x8xi32>
    %cst_5 = arith.constant 0xFF800000 : f32
    %16 = vector.broadcast %cst_5 : f32 to vector<1x8x8xf32>
    %17 = arith.select %15, %10, %16 : vector<1x8x8xi1>, vector<1x8x8xf32>
    %cst_6 = arith.constant dense<0xFF800000> : vector<1x8xf32>
    %18 = vector.multi_reduction <maximumf>, %17, %cst_6 [2] : vector<1x8x8xf32> to vector<1x8xf32>
    %19 = vector.shape_cast %18 : vector<1x8xf32> to vector<1x8x1xf32>
    %20 = vector.broadcast %19 : vector<1x8x1xf32> to vector<1x8x8xf32>
    %21 = arith.subf %17, %20 : vector<1x8x8xf32>
    %22 = math.exp %21 : vector<1x8x8xf32>
    %cst_7 = arith.constant dense<0.000000e+00> : vector<1x8xf32>
    %23 = vector.multi_reduction <add>, %22, %cst_7 [2] : vector<1x8x8xf32> to vector<1x8xf32>
    %24 = vector.shape_cast %23 : vector<1x8xf32> to vector<1x8x1xf32>
    %25 = tpu.reciprocal %24 {approx = true} : vector<1x8x1xf32> -> vector<1x8x1xf32>
    %26 = vector.broadcast %25 : vector<1x8x1xf32> to vector<1x8x8xf32>
    %27 = arith.mulf %22, %26 : vector<1x8x8xf32>
    %cst_8 = arith.constant dense<0.000000e+00> : vector<1x8x16xf32>
    %28 = tpu.matmul %27, %9, %cst_8 {dimension_numbers = #tpu.dot_dimension_numbers<[2], [1], [1], [2], [0, 0, 0, 1, 1, 2], [0], [0]>} : vector<1x8x8xf32>, vector<1x8x16xf32>, vector<1x8x16xf32> -> vector<1x8x16xf32>
    %c0_9 = arith.constant 0 : index
    %c0_10 = arith.constant 0 : index
    %c0_11 = arith.constant 0 : index
    %29 = vector.load %arg3[%c0_9, %c0_10, %c0_11] : memref<1x8x16xf32, #tpu.memory_space<vmem>>, vector<1x8x16xf32>
    tpu.vector_store %arg3[%c0_9, %c0_10, %c0_11], %28 {strides = array<i32>} : memref<1x8x16xf32, #tpu.memory_space<vmem>>, vector<1x8x16xf32>,
    return
  }
  func.func @transform_0(%arg0: i32) -> (i32, i32, i32) {
    %c0_i32 = arith.constant 0 : i32
    %c0_i32_0 = arith.constant 0 : i32
    %c0_i32_1 = arith.constant 0 : i32
    return %arg0, %c0_i32, %c0_i32_0 : i32, i32, i32
  }
  func.func @transform_1(%arg0: i32) -> (i32, i32) {
    %c0_i32 = arith.constant 0 : i32
    %c0_i32_0 = arith.constant 0 : i32
    %c0_i32_1 = arith.constant 0 : i32
    return %c0_i32, %c0_i32_0 : i32, i32
  }
  func.func @transform_2(%arg0: i32) -> (i32, i32, i32) {
    %c0_i32 = arith.constant 0 : i32
    %c0_i32_0 = arith.constant 0 : i32
    %c0_i32_1 = arith.constant 0 : i32
    return %arg0, %c0_i32, %c0_i32_0 : i32, i32, i32
  }
}

</mosaic_0001>

<llo_original>
// kernel: head_forward.1
$region0: #{head_forward.1}
  #allocation0 [shape = 'u32[]', space=smem, size = 0x4, offset = 0x4, fixed_abs, tag = 'smem constant byte address 0x4 - core index']
  #allocation1 [shape = 'u32[144,128]{1,0:T(1,128)}', space=vmem, size = 0x12000, scoped, tag = 'internal scratch']
  %s0 = inlined_call_operand.hbm [shape: f32[2,8,32], index: 0, kind: input, shape index: {}]
  %s1 = inlined_call_operand.hbm [shape: f32[32,48], index: 1, kind: input, shape index: {}]
  %s2 = inlined_call_operand.hbm [shape: f32[2,8,16], index: 2, kind: output, shape index: {}]
  %s3 = sld [smem:[#allocation0]]
  $region49: #{head_forward.1} parent=0
    _
  %s5 = ssub.s32 1, %s3
  %s6 = scalar_select 0, %s5, %s3
  $region1: #{head_forward.1} parent=0
    #allocation2 [shape = 'u8[8192]{0}', space=vmem, size = 0x2000, scoped, tag = 'input window, operand 0']
    #allocation3 [shape = 's32[2]{0}', space=sflag, size = 0x8, scoped, tag = 'scoped memory for head_forward.1']
    #allocation4 [shape = 's32[2]{0}', space=sflag, size = 0x8, scoped, tag = 'scoped memory for head_forward.1']
    #allocation5 [shape = 'u8[16384]{0}', space=vmem, size = 0x4000, scoped, tag = 'input window, operand 1, single buffered']
    #allocation6 [shape = 's32[1]{0}', space=sflag, size = 0x4, scoped, tag = 'scoped memory for head_forward.1']
    #allocation7 [shape = 'u8[8192]{0}', space=vmem, size = 0x2000, scoped, tag = 'output window, operand 0']
    %7 = vsyncpa [#allocation3], 0
    %s8 = scalar_lea.sflag [#allocation3], 1
    %9 = vsyncpa %s8, 0
    %10 = vsyncpa [#allocation6], 0
    %11 = vsyncpa [#allocation4], 0
    %s12 = scalar_lea.sflag [#allocation4], 1
    %13 = vsyncpa %s12, 0
    loop: start=0, step=1, limit=4
    $region2: #{head_forward.1} parent=1 // loop_pre_header
      _
    $region3: #{head_forward.1} parent=1 // loop_header
      %s15 = sphi 0, %s19
      %p16 = scmp.ge.s32.totalorder %s15, 4
      %s25 = sphi 0, %s27
      %s28 = sphi 0, %s25
      %s29 = sphi 0, %s28
      %s45 = sphi 0, %s29
      %s49 = sphi 0, %s49
      %s51 = sphi 0, %s49
      %s52 = sphi 0, %s51
      %s66 = sphi 0, %s52
      %s72 = sphi 0, %s74
      %s75 = sphi 0, %s72
      %s76 = sphi 0, %s75
      %s92 = sphi 0, %s76
    $region4: #{head_forward.1} parent=1 // loop_header_branch
      %18 = sbr.rel (%p16) target = $region8
    $region5: #{head_forward.1} parent=1 // loop_body
      %s20 = ssub.s32 %s15, 1
      %s21 = ssub.s32 %s15, 2
      %s22 = sadd.s32 %s15, 1
      %s23 = ssub.s32 %s15, %s22
      %p24 = scmp.eq.s32.totalorder %s23, 0
      %s26 = sadd.s32 %s25, 1
      %s27 = scalar_select %p24, %s25, %s26
      %p30 = pneg %p24
      %p31 = scmp.eq.s32.totalorder %s15, 1
      %p32 = por %p30, %p31
      %p33 = scmp.ne.s32.totalorder %s25, %s28
      %p34 = scmp.eq.s32.totalorder %s15, 0
      %p35 = por %p33, %p34
      %p36 = scmp.ne.s32.totalorder %s25, %s28
      %p37 = scmp.eq.s32.totalorder %s20, 1
      %p38 = por %p36, %p37
      %p39 = scmp.ne.s32.totalorder %s28, %s29
      %p40 = scmp.eq.s32.totalorder %s20, 0
      %p41 = por %p39, %p40
      %p42 = scmp.ne.s32.totalorder %s28, %s29
      %p43 = scmp.eq.s32.totalorder %s21, 1
      %p44 = por %p42, %p43
      %p46 = scmp.ne.s32.totalorder %s29, %s45
      %p47 = scmp.eq.s32.totalorder %s21, 0
      %p48 = por %p46, %p47
      %s50 = sadd.s32 %s49, 1
      %p53 = scmp.eq.s32.totalorder %s15, 1
      %p54 = scmp.ne.s32.totalorder %s49, %s51
      %p55 = scmp.eq.s32.totalorder %s15, 0
      %p56 = por %p54, %p55
      %p57 = scmp.ne.s32.totalorder %s49, %s51
      %p58 = scmp.eq.s32.totalorder %s20, 1
      %p59 = por %p57, %p58
      %p60 = scmp.ne.s32.totalorder %s51, %s52
      %p61 = scmp.eq.s32.totalorder %s20, 0
      %p62 = por %p60, %p61
      %p63 = scmp.ne.s32.totalorder %s51, %s52
      %p64 = scmp.eq.s32.totalorder %s21, 1
      %p65 = por %p63, %p64
      %p67 = scmp.ne.s32.totalorder %s52, %s66
      %p68 = scmp.eq.s32.totalorder %s21, 0
      %p69 = por %p67, %p68
      %s70 = ssub.s32 %s15, %s22
      %p71 = scmp.eq.s32.totalorder %s70, 0
      %s73 = sadd.s32 %s72, 1
      %s74 = scalar_select %p71, %s72, %s73
      %p77 = pneg %p71
      %p78 = scmp.eq.s32.totalorder %s15, 1
      %p79 = por %p77, %p78
      %p80 = scmp.ne.s32.totalorder %s72, %s75
      %p81 = scmp.eq.s32.totalorder %s15, 0
      %p82 = por %p80, %p81
      %p83 = scmp.ne.s32.totalorder %s72, %s75
      %p84 = scmp.eq.s32.totalorder %s20, 1
      %p85 = por %p83, %p84
      %p86 = scmp.ne.s32.totalorder %s75, %s76
      %p87 = scmp.eq.s32.totalorder %s20, 0
      %p88 = por %p86, %p87
      %p89 = scmp.ne.s32.totalorder %s75, %s76
      %p90 = scmp.eq.s32.totalorder %s21, 1
      %p91 = por %p89, %p90
      %p93 = scmp.ne.s32.totalorder %s76, %s92
      %p94 = scmp.eq.s32.totalorder %s21, 0
      %p95 = por %p93, %p94
      %p96 = scmp.le.s32.totalorder 1, %s15
      %p97 = scmp.lt.s32.totalorder %s15, 3
      %p98 = pnand %p96, %p97
      %p99 = pneg %p98
      // Predicated region
      $region9: #{head_forward.1} parent=5 // pred_check
        _
      $region10: #{head_forward.1} parent=5 // pred_check_branch
        %101 = sbr.rel (%p98) target = $region12
      $region11: #{head_forward.1} parent=5 // pred_region
        %s102 = ssub.s32 %s15, 1
        // Predicated region
        $region13: #{head_forward.1} parent=11 // pred_check
          %p103 = pneg %p62
        $region14: #{head_forward.1} parent=11 // pred_check_branch
          %105 = sbr.rel (%p103) target = $region16
        $region15: #{head_forward.1} parent=11 // pred_region
          %s107 = ssub.s32 512, 512
          %108 = vsyncadd [#allocation6], %s107
          %s109 = sshll.u32 [#allocation5], 4
          %s110 = int_to_ptr.vmem [resolvable:$true] %s109
          %115 = dma.hbm_to_vmem [thread:$0]  %s1, 512, %s110, [#allocation6], 128, 128, 8
        $region16: #{head_forward.1} parent=11 // pred_fallthru
          _
      $region12: #{head_forward.1} parent=5 // pred_fallthru
        _
      %p116 = scmp.lt.s32.totalorder %s15, 2
      // Predicated region
      $region17: #{head_forward.1} parent=5 // pred_check
        %p117 = pneg %p116
      $region18: #{head_forward.1} parent=5 // pred_check_branch
        %119 = sbr.rel (%p117) target = $region20
      $region19: #{head_forward.1} parent=5 // pred_region
        // Predicated region
        $region21: #{head_forward.1} parent=19 // pred_check
          %p120 = pneg %p35
        $region22: #{head_forward.1} parent=19 // pred_check_branch
          %122 = sbr.rel (%p120) target = $region24
        $region23: #{head_forward.1} parent=19 // pred_region
          %s123 = sand.u32 %s25, 1
          %s124 = scalar_lea.sflag [#allocation3], %s123
          %s125 = sand.u32 %s25, 1
          %s126 = smul.addr %s125, 8
          %s127 = scalar_lea.vmem [#allocation2], %s126
          %s129 = ssub.s32 128, 128
          %130 = vsyncadd %s124, %s129
          %s131 = smul.addr %s15, 128
          %s132 = scalar_lea.hbm %s0, %s131
          %s134 = sshll.u32 %s127, 4
          %s135 = int_to_ptr.vmem [resolvable:$true] %s134
          %137 = dma.hbm_to_vmem [thread:$0]  %s132, 128, %s135, %s124
        $region24: #{head_forward.1} parent=19 // pred_fallthru
          _
      $region20: #{head_forward.1} parent=5 // pred_fallthru
        _
      %p138 = scmp.le.s32.totalorder 1, %s15
      %p139 = scmp.lt.s32.totalorder %s15, 3
      %p140 = pnand %p138, %p139
      %p141 = pneg %p140
      // Predicated region
      $region25: #{head_forward.1} parent=5 // pred_check
        _
      $region26: #{head_forward.1} parent=5 // pred_check_branch
        %143 = sbr.rel (%p140) target = $region28
      $region27: #{head_forward.1} parent=5 // pred_region
        %s144 = ssub.s32 %s15, 1
        %s145 = sand.u32 %s28, 1
        %s146 = scalar_lea.sflag [#allocation3], %s145
        %s147 = sand.u32 %s28, 1
        %s148 = smul.addr %s147, 8
        %s149 = scalar_lea.vmem [#allocation2], %s148
        // Predicated region
        $region29: #{head_forward.1} parent=27 // pred_check
          %p150 = pneg %p41
        $region30: #{head_forward.1} parent=27 // pred_check_branch
          %152 = sbr.rel (%p150) target = $region32
        $region31: #{head_forward.1} parent=27 // pred_region
          %153 = dma.done %s146, 128
        $region32: #{head_forward.1} parent=27 // pred_fallthru
          _
        // Predicated region
        $region33: #{head_forward.1} parent=27 // pred_check
          %p154 = pneg %p62
        $region34: #{head_forward.1} parent=27 // pred_check_branch
          %156 = sbr.rel (%p154) target = $region36
        $region35: #{head_forward.1} parent=27 // pred_region
          %157 = dma.done [#allocation6], 512
        $region36: #{head_forward.1} parent=27 // pred_fallthru
          _
        %s158 = sand.u32 %s28, 1
        %s159 = scalar_lea.sflag [#allocation3], %s158
        %s160 = sand.u32 %s28, 1
        %s161 = smul.addr %s160, 8
        %s162 = scalar_lea.vmem [#allocation2], %s161
        %p163 = pneg %p41
        %p164 = pneg %p38
        %p165 = pneg %p62
        %p166 = pneg %p59
        %p167 = pneg %p88
        %p168 = pneg %p85
        %s169 = sand.u32 %s75, 1
        %s170 = scalar_lea.sflag [#allocation4], %s169
        %s171 = sand.u32 %s75, 1
        %s172 = smul.addr %s171, 8
        %s173 = scalar_lea.vmem [#allocation7], %s172
        %v174 = vld [vmem:[%s149] sm:$0xff]
        %v175 = vld [vmem:[#allocation5] sm:$0xff]
        %v176 = vld [vmem:[#allocation5 + $0x8] sm:$0xff]
        %v177 = vld [vmem:[#allocation5 + $0x10] sm:$0xff]
        %v178 = vld [vmem:[#allocation5 + $0x18] sm:$0xff]
        %vm179 = vcmask 261120
        %v181 = vsel %vm179, %v174, 0
        %183 = vmatprep.subr.mxu0 0.0
        %184 = vmatpush1.msra.mxu0 %v175
        %185 = vmatprep.subr.mxu0 0.0
        %186 = vmatpush1.msra.mxu0 %v176
        %187 = vmatprep.subr.mxu0 0.0
        %188 = vmatpush1.msra.mxu0 %v177
        %189 = vmatprep.subr.mxu0 0.0
        %190 = vmatpush1.msra.mxu0 %v178
        %191 = vmatprep.subr.mxu0 0.0
        %192 = vmatpush1.msra.mxu0 0.0
        %193 = vmatprep.subr.mxu0 0.0
        %194 = vmatpush1.msra.mxu0 0.0
        %195 = vmatprep.subr.mxu0 0.0
        %196 = vmatpush1.msra.mxu0 0.0
        %197 = vmatprep.subr.mxu0 0.0
        %198 = vmatpush1.msra.mxu0 0.0
        %199 = vmatprep.subr.mxu0 0.0
        %200 = vmatpush1.msra.mxu0 0.0
        %201 = vmatprep.subr.mxu0 0.0
        %202 = vmatpush1.msra.mxu0 0.0
        %203 = vmatprep.subr.mxu0 0.0
        %204 = vmatpush1.msra.mxu0 0.0
        %205 = vmatprep.subr.mxu0 0.0
        %206 = vmatpush1.msra.mxu0 0.0
        %207 = vmatprep.subr.mxu0 0.0
        %208 = vmatpush1.msra.mxu0 0.0
        %209 = vmatprep.subr.mxu0 0.0
        %210 = vmatpush1.msra.mxu0 0.0
        %211 = vmatprep.subr.mxu0 0.0
        %212 = vmatpush1.msra.mxu0 0.0
        %213 = vmatprep.subr.mxu0 0.0
        %214 = vmatpush1.msra.mxu0 0.0
        %215 = vmatprep.subr.mxu0 0.0
        %216 = vmatpush1.msra.mxu0 0.0
        %217 = vmatprep.subr.mxu0 0.0
        %218 = vmatpush1.msra.mxu0 0.0
        %219 = vmatprep.subr.mxu0 0.0
        %220 = vmatpush1.msra.mxu0 0.0
        %221 = vmatprep.subr.mxu0 0.0
        %222 = vmatpush1.msra.mxu0 0.0
        %223 = vmatprep.subr.mxu0 0.0
        %224 = vmatpush1.msra.mxu0 0.0
        %225 = vmatprep.subr.mxu0 0.0
        %226 = vmatpush1.msra.mxu0 0.0
        %227 = vmatprep.subr.mxu0 0.0
        %228 = vmatpush1.msra.mxu0 0.0
        %229 = vmatprep.subr.mxu0 0.0
        %230 = vmatpush1.msra.mxu0 0.0
        %231 = vmatprep.subr.mxu0 0.0
        %232 = vmatpush1.msra.mxu0 0.0
        %233 = vmatprep.subr.mxu0 0.0
        %234 = vmatpush1.msra.mxu0 0.0
        %235 = vmatprep.subr.mxu0 0.0
        %236 = vmatpush1.msra.mxu0 0.0
        %237 = vmatprep.subr.mxu0 0.0
        %238 = vmatpush1.msra.mxu0 0.0
        %239 = vmatprep.subr.mxu0 0.0
        %240 = vmatpush1.msra.mxu0 0.0
        %241 = vmatprep.subr.mxu0 0.0
        %242 = vmatpush1.msra.mxu0 0.0
        %243 = vmatprep.subr.mxu0 0.0
        %244 = vmatpush1.msra.mxu0 0.0
        %245 = vmatprep.subr.mxu0 0.0
        %246 = vmatpush1.msra.mxu0 0.0
        %247 = vmatprep.mubr.f32.mxu0 0.0
        %248 = vmatmul.mubr.f32.gmra.mrb[0].mxu0 %v181
        %v249 = vpop.f32.mrb[0].mxu0
        %v250 = vadd.f32 0.0, %v249
        %v251 = vpop.f32.mrb[0].mxu0
        %252 = vdwg.mxu0
        %254 = vrot.lane.b32.xlu0 %v250, 112
        %v255 = vpop.permute.xlu0 %254
        %vm256 = vcmask 130048
        %v257 = vsel %vm256, %v250, 0
        %v259 = vsel %vm256, %v255, 0
        %261 = vmatprep.subr.mxu0 0.0
        %262 = vmatpush1.xpose.msra.mxu0 %v259
        %263 = vmatprep.subr.mxu0 0.0
        %264 = vmatpush1.xpose.msra.mxu0 0.0
        %265 = vmatprep.subr.mxu0 0.0
        %266 = vmatpush1.xpose.msra.mxu0 0.0
        %267 = vmatprep.subr.mxu0 0.0
        %268 = vmatpush1.xpose.msra.mxu0 0.0
        %269 = vmatprep.subr.mxu0 0.0
        %270 = vmatpush1.xpose.msra.mxu0 0.0
        %271 = vmatprep.subr.mxu0 0.0
        %272 = vmatpush1.xpose.msra.mxu0 0.0
        %273 = vmatprep.subr.mxu0 0.0
        %274 = vmatpush1.xpose.msra.mxu0 0.0
        %275 = vmatprep.subr.mxu0 0.0
        %276 = vmatpush1.xpose.msra.mxu0 0.0
        %277 = vmatprep.subr.mxu0 0.0
        %278 = vmatpush1.xpose.msra.mxu0 0.0
        %279 = vmatprep.subr.mxu0 0.0
        %280 = vmatpush1.xpose.msra.mxu0 0.0
        %281 = vmatprep.subr.mxu0 0.0
        %282 = vmatpush1.xpose.msra.mxu0 0.0
        %283 = vmatprep.subr.mxu0 0.0
        %284 = vmatpush1.xpose.msra.mxu0 0.0
        %285 = vmatprep.subr.mxu0 0.0
        %286 = vmatpush1.xpose.msra.mxu0 0.0
        %287 = vmatprep.subr.mxu0 0.0
        %288 = vmatpush1.xpose.msra.mxu0 0.0
        %289 = vmatprep.subr.mxu0 0.0
        %290 = vmatpush1.xpose.msra.mxu0 0.0
        %291 = vmatprep.subr.mxu0 0.0
        %292 = vmatpush1.xpose.msra.mxu0 0.0
        %293 = vmatprep.subr.mxu0 0.0
        %294 = vmatpush1.xpose.msra.mxu0 0.0
        %295 = vmatprep.subr.mxu0 0.0
        %296 = vmatpush1.xpose.msra.mxu0 0.0
        %297 = vmatprep.subr.mxu0 0.0
        %298 = vmatpush1.xpose.msra.mxu0 0.0
        %299 = vmatprep.subr.mxu0 0.0
        %300 = vmatpush1.xpose.msra.mxu0 0.0
        %301 = vmatprep.subr.mxu0 0.0
        %302 = vmatpush1.xpose.msra.mxu0 0.0
        %303 = vmatprep.subr.mxu0 0.0
        %304 = vmatpush1.xpose.msra.mxu0 0.0
        %305 = vmatprep.subr.mxu0 0.0
        %306 = vmatpush1.xpose.msra.mxu0 0.0
        %307 = vmatprep.subr.mxu0 0.0
        %308 = vmatpush1.xpose.msra.mxu0 0.0
        %309 = vmatprep.subr.mxu0 0.0
        %310 = vmatpush1.xpose.msra.mxu0 0.0
        %311 = vmatprep.subr.mxu0 0.0
        %312 = vmatpush1.xpose.msra.mxu0 0.0
        %313 = vmatprep.subr.mxu0 0.0
        %314 = vmatpush1.xpose.msra.mxu0 0.0
        %315 = vmatprep.subr.mxu0 0.0
        %316 = vmatpush1.xpose.msra.mxu0 0.0
        %317 = vmatprep.subr.mxu0 0.0
        %318 = vmatpush1.xpose.msra.mxu0 0.0
        %319 = vmatprep.subr.mxu0 0.0
        %320 = vmatpush1.xpose.msra.mxu0 0.0
        %321 = vmatprep.subr.mxu0 0.0
        %322 = vmatpush1.xpose.msra.mxu0 0.0
        %323 = vmatprep.subr.mxu0 0.0
        %324 = vmatpush1.xpose.msra.mxu0 0.0
        %325 = vmatprep.mubr.f32.mxu0 0.0
        %326 = vmatmul.mubr.f32.gmra.mrb[0].mxu0 %v257
        %v327 = vpop.f32.mrb[0].mxu0
        %v328 = vadd.f32 0.0, %v327
        %v329 = vpop.f32.mrb[0].mxu0
        %330 = vdwg.mxu0
        %v331 = vlaneseq
        %v332 = vshrl.u32 %v331, 7
        %v333 = vlaneseq
        %v334 = vand.u32 %v333, 127
        %vm335 = vcmp.le.s32.totalorder %v334, %v332
        %v336 = vsel %vm335, %v328, -inf
        %vm337 = vcmask 64512
        %v338 = vsel %vm337, %v336, -inf
        %339 = vmax.xlane.f32.xlu0 %v338
        %v340 = vpop.xlane.xlu0 %339
        %v341 = vsub.f32 %v336, %v340
        %v342 = vmul.f32 %v341, 1.442695
        %v343 = vpow.pop %v342
        %v344 = vsel %vm337, %v343, 0.0
        %345 = vadd.xlane.f32.xlu0 %v344
        %v346 = vpop.xlane.xlu0 %345
        %v347 = vrcp.pop %v346
        %v348 = vmul.f32 %v343, %v347
        %349 = vrot.lane.b32.xlu0 %v250, 96
        %v350 = vpop.permute.xlu0 %349
        %v353 = vsel %vm337, %v348, 0
        %355 = vmatprep.subr.mxu0 0.0
        %356 = vmatpush1.msra.mxu0 %v350
        %357 = vmatprep.subr.mxu0 0.0
        %358 = vmatpush1.msra.mxu0 0.0
        %359 = vmatprep.subr.mxu0 0.0
        %360 = vmatpush1.msra.mxu0 0.0
        %361 = vmatprep.subr.mxu0 0.0
        %362 = vmatpush1.msra.mxu0 0.0
        %363 = vmatprep.subr.mxu0 0.0
        %364 = vmatpush1.msra.mxu0 0.0
        %365 = vmatprep.subr.mxu0 0.0
        %366 = vmatpush1.msra.mxu0 0.0
        %367 = vmatprep.subr.mxu0 0.0
        %368 = vmatpush1.msra.mxu0 0.0
        %369 = vmatprep.subr.mxu0 0.0
        %370 = vmatpush1.msra.mxu0 0.0
        %371 = vmatprep.subr.mxu0 0.0
        %372 = vmatpush1.msra.mxu0 0.0
        %373 = vmatprep.subr.mxu0 0.0
        %374 = vmatpush1.msra.mxu0 0.0
        %375 = vmatprep.subr.mxu0 0.0
        %376 = vmatpush1.msra.mxu0 0.0
        %377 = vmatprep.subr.mxu0 0.0
        %378 = vmatpush1.msra.mxu0 0.0
        %379 = vmatprep.subr.mxu0 0.0
        %380 = vmatpush1.msra.mxu0 0.0
        %381 = vmatprep.subr.mxu0 0.0
        %382 = vmatpush1.msra.mxu0 0.0
        %383 = vmatprep.subr.mxu0 0.0
        %384 = vmatpush1.msra.mxu0 0.0
        %385 = vmatprep.subr.mxu0 0.0
        %386 = vmatpush1.msra.mxu0 0.0
        %387 = vmatprep.subr.mxu0 0.0
        %388 = vmatpush1.msra.mxu0 0.0
        %389 = vmatprep.subr.mxu0 0.0
        %390 = vmatpush1.msra.mxu0 0.0
        %391 = vmatprep.subr.mxu0 0.0
        %392 = vmatpush1.msra.mxu0 0.0
        %393 = vmatprep.subr.mxu0 0.0
        %394 = vmatpush1.msra.mxu0 0.0
        %395 = vmatprep.subr.mxu0 0.0
        %396 = vmatpush1.msra.mxu0 0.0
        %397 = vmatprep.subr.mxu0 0.0
        %398 = vmatpush1.msra.mxu0 0.0
        %399 = vmatprep.subr.mxu0 0.0
        %400 = vmatpush1.msra.mxu0 0.0
        %401 = vmatprep.subr.mxu0 0.0
        %402 = vmatpush1.msra.mxu0 0.0
        %403 = vmatprep.subr.mxu0 0.0
        %404 = vmatpush1.msra.mxu0 0.0
        %405 = vmatprep.subr.mxu0 0.0
        %406 = vmatpush1.msra.mxu0 0.0
        %407 = vmatprep.subr.mxu0 0.0
        %408 = vmatpush1.msra.mxu0 0.0
        %409 = vmatprep.subr.mxu0 0.0
        %410 = vmatpush1.msra.mxu0 0.0
        %411 = vmatprep.subr.mxu0 0.0
        %412 = vmatpush1.msra.mxu0 0.0
        %413 = vmatprep.subr.mxu0 0.0
        %414 = vmatpush1.msra.mxu0 0.0
        %415 = vmatprep.subr.mxu0 0.0
        %416 = vmatpush1.msra.mxu0 0.0
        %417 = vmatprep.subr.mxu0 0.0
        %418 = vmatpush1.msra.mxu0 0.0
        %419 = vmatprep.mubr.f32.mxu0 0.0
        %420 = vmatmul.mubr.f32.gmra.mrb[0].mxu0 %v353
        %v421 = vpop.f32.mrb[0].mxu0
        %v422 = vadd.f32 0.0, %v421
        %v423 = vpop.f32.mrb[0].mxu0
        %424 = vdwg.mxu0
        %425 = vst.msk [vmem:[%s173] sm:$0xff] %vm256, %v422
        %s426 = sand.u32 %s75, 1
        %s427 = scalar_lea.sflag [#allocation4], %s426
        %s428 = sand.u32 %s75, 1
        %s429 = smul.addr %s428, 8
        %s430 = scalar_lea.vmem [#allocation7], %s429
        // Predicated region
        $region37: #{head_forward.1} parent=27 // pred_check
          %p431 = pneg %p85
        $region38: #{head_forward.1} parent=27 // pred_check_branch
          %433 = sbr.rel (%p431) target = $region40
        $region39: #{head_forward.1} parent=27 // pred_region
          %s435 = ssub.s32 128, 128
          %436 = vsyncadd %s427, %s435
          %s437 = smul.addr %s20, 128
          %s438 = scalar_lea.hbm %s2, %s437
          %s440 = sshll.u32 %s430, 4
          %s441 = int_to_ptr.vmem [resolvable:$true] %s440
          %443 = dma.vmem_to_hbm [thread:$0]  %s441, 128, %s438, %s427
        $region40: #{head_forward.1} parent=27 // pred_fallthru
          _
      $region28: #{head_forward.1} parent=5 // pred_fallthru
        _
      %p444 = scmp.le.s32.totalorder 2, %s15
      // Predicated region
      $region41: #{head_forward.1} parent=5 // pred_check
        %p445 = pneg %p444
      $region42: #{head_forward.1} parent=5 // pred_check_branch
        %447 = sbr.rel (%p445) target = $region44
      $region43: #{head_forward.1} parent=5 // pred_region
        %s448 = ssub.s32 %s15, 2
        // Predicated region
        $region45: #{head_forward.1} parent=43 // pred_check
          %p449 = pneg %p91
        $region46: #{head_forward.1} parent=43 // pred_check_branch
          %451 = sbr.rel (%p449) target = $region48
        $region47: #{head_forward.1} parent=43 // pred_region
          %s452 = sand.u32 %s76, 1
          %s453 = scalar_lea.sflag [#allocation4], %s452
          %s454 = sand.u32 %s76, 1
          %s455 = smul.addr %s454, 8
          %s456 = scalar_lea.vmem [#allocation7], %s455
          %457 = dma.done %s453, 128
        $region48: #{head_forward.1} parent=43 // pred_fallthru
          _
      $region44: #{head_forward.1} parent=5 // pred_fallthru
        _
    $region6: #{head_forward.1} parent=1 // loop_footer
      %s19 = sadd.s32 1, %s15
    $region7: #{head_forward.1} parent=1 // loop_footer_branch
      %14 = sbr.rel target = $region3
    $region8: #{head_forward.1} parent=1 // loop_exit
      _
    %458 = vsyncpa [#allocation3], 1
    %s459 = scalar_lea.sflag [#allocation3], 1
    %460 = vsyncpa %s459, 1
    %461 = vsyncpa [#allocation6], 1
    %462 = vsyncpa [#allocation4], 1
    %s463 = scalar_lea.sflag [#allocation4], 1
    %464 = vsyncpa %s463, 1

</llo_original>
